<compile_context>
chip_gen: v6e
topology: v6e:2x2x1
jax: 0.10.0
libtpu: 0.0.40
codegen_flags: <defaults>
</compile_context>

<pallas_src>
import math
from functools import partial

import jax
import jax.numpy as jnp
from jax.experimental import pallas as pl
from jax.experimental.pallas import tpu as pltpu


def _vmem_spec():
    # Whole-array, untiled, VMEM-resident operand (avoids the (8,128)
    # block-shape divisibility rule entirely).
    return pl.BlockSpec(memory_space=pltpu.MemorySpace.VMEM)


def _groupnorm_kernel(x_ref, wb_ref, o_ref, *, num_groups, eps):
    x = x_ref[...].astype(jnp.float32)                  # (N, C)
    n, c = x.shape
    g = num_groups
    cpg = c // g                                        # channels per group
    cnt = n * cpg                                       # elems per group (whole batch)

    wb = wb_ref[...].astype(jnp.float32)                # (2, C): row0=weight, row1=bias
    w = wb[0:1, :]
    b = wb[1:2, :]

    # One pass of per-channel statistics (sublane reductions).
    col_sum = jnp.sum(x, axis=0, keepdims=True)         # (1, C)
    col_sq = jnp.sum(x * x, axis=0, keepdims=True)      # (1, C)

    if g == 1:
        # Single group: plain full reductions, no matmuls needed.
        mean_c = jnp.sum(col_sum, axis=1, keepdims=True) / cnt      # (1, 1)
        sq_c = jnp.sum(col_sq, axis=1, keepdims=True)               # (1, 1)
        var = (sq_c - cnt * mean_c * mean_c) / (cnt - 1)            # unbiased
        inv_c = jax.lax.rsqrt(jnp.maximum(var, 0.0) + eps)          # (1, 1), EUP
    else:
        # Group aggregation via tiny one-hot matmuls (no lane slicing/concat).
        ch_cg = jax.lax.broadcasted_iota(jnp.int32, (c, g), 0)
        gr_cg = jax.lax.broadcasted_iota(jnp.int32, (c, g), 1)
        onehot_cg = (ch_cg // cpg == gr_cg).astype(jnp.float32)     # (C, G)
        gr_gc = jax.lax.broadcasted_iota(jnp.int32, (g, c), 0)
        ch_gc = jax.lax.broadcasted_iota(jnp.int32, (g, c), 1)
        onehot_gc = (ch_gc // cpg == gr_gc).astype(jnp.float32)     # (G, C)

        stats = jnp.concatenate([col_sum, col_sq], axis=0)          # (2, C)
        grp = jnp.dot(stats, onehot_cg,
                      preferred_element_type=jnp.float32)           # (2, G)
        mean_g = grp[0:1, :] / cnt                                  # (1, G)
        var_g = (grp[1:2, :] - cnt * mean_g * mean_g) / (cnt - 1)   # unbiased
        inv_g = jax.lax.rsqrt(jnp.maximum(var_g, 0.0) + eps)        # (1, G), EUP

        mi = jnp.concatenate([mean_g, inv_g], axis=0)               # (2, G)
        back = jnp.dot(mi, onehot_gc,
                       preferred_element_type=jnp.float32)          # (2, C)
        mean_c = back[0:1, :]
        inv_c = back[1:2, :]

    # y = (x - mean) * inv * w + b  ==  x * scale + shift  (single fused FMA)
    scale = inv_c * w                                   # (1, C)
    shift = b - mean_c * scale                          # (1, C)
    o_ref[...] = (x * scale + shift).astype(o_ref.dtype)


def groupnorm_pallas(x, weight, bias, *, num_groups, eps=1e-5):
    n, c = x.shape
    assert c % num_groups == 0, "C must be divisible by num_groups"
    weight = jnp.asarray(weight)
    bias = jnp.asarray(bias)
    assert weight.size == c and bias.size == c, "weight/bias must have C elements"
    # Stack weight & bias into one (2, C) operand -> one fewer DMA descriptor.
    wb = jnp.concatenate(
        [weight.reshape(1, c).astype(jnp.float32),
         bias.reshape(1, c).astype(jnp.float32)], axis=0)

    return pl.pallas_call(
        partial(_groupnorm_kernel, num_groups=num_groups, eps=eps),
        out_shape=jax.ShapeDtypeStruct((n, c), x.dtype),   # output dtype follows x
        in_specs=[_vmem_spec(), _vmem_spec()],
        out_specs=_vmem_spec(),
    )(x, wb)


def groupnorm_ref(x, weight, bias, num_groups, eps):
    # pure-JAX transliteration of the PyTorch forward (self-check only)
    n, c = x.shape
    xg = x.T.reshape(num_groups, -1)
    mean = jnp.mean(xg, axis=-1, keepdims=True)
    var = jnp.var(xg, axis=-1, ddof=1, keepdims=True)   # unbiased, like torch.var
    xh = (xg - mean) / jnp.sqrt(var + eps)
    xh = xh.reshape(c, n).T
    return xh * weight.reshape(1, c) + bias.reshape(1, c)


if __name__ == "__main__":
    N, C = 8, 48          # (nodes, features) as used by the surrounding graph net
    EPS = 1e-5

    key = jax.random.PRNGKey(0)
    kx, kw, kb = jax.random.split(key, 3)
    x = jax.random.normal(kx, (N, C), jnp.float32)
    stdv = 1.0 / math.sqrt(C)                           # reset_parameters() init
    weight = jax.random.uniform(kw, (1, C), jnp.float32, -stdv, stdv)
    bias = jax.random.uniform(kb, (1, C), jnp.float32, -stdv, stdv)

    for G in (1, 4):      # G=1 is how the autoencoder instantiates GroupNorm
        out = jax.jit(partial(groupnorm_pallas, num_groups=G, eps=EPS))(x, weight, bias)
        jax.block_until_ready(out)
        ref = groupnorm_ref(x, weight, bias, G, EPS)
        assert out.shape == (N, C) and out.dtype == x.dtype
        err = float(jnp.max(jnp.abs(out - ref)))
        assert err < 1e-4, f"num_groups={G}: max abs err {err}"

    # bf16 I/O path: output dtype follows input, reduction math stays f32.
    x16 = x.astype(jnp.bfloat16)
    out16 = jax.jit(partial(groupnorm_pallas, num_groups=1, eps=EPS))(x16, weight, bias)
    jax.block_until_ready(out16)
    ref16 = groupnorm_ref(x16.astype(jnp.float32), weight, bias, 1, EPS)
    assert out16.dtype == jnp.bfloat16
    err16 = float(jnp.max(jnp.abs(out16.astype(jnp.float32) - ref16)))
    assert err16 < 5e-2, f"bf16 path: max abs err {err16}"

    print("KERNEL_OK")
</pallas_src>

<mosaic_0001>
module attributes {stable_mosaic.version = 11 : i64} {
  func.func @_groupnorm_kernel(%arg0: memref<8x48xf32, #tpu.memory_space<vmem>>, %arg1: memref<2x48xf32, #tpu.memory_space<vmem>>, %arg2: memref<8x48xf32, #tpu.memory_space<vmem>>) attributes {dimension_semantics = [], scalar_prefetch = 0 : i64, scratch_operands = 0 : i64, tpu.core_type = #tpu.core_type<tc>} {
    %c0 = arith.constant 0 : index
    %c0_0 = arith.constant 0 : index
    %0 = vector.load %arg0[%c0, %c0_0] : memref<8x48xf32, #tpu.memory_space<vmem>>, vector<8x48xf32>
    %c0_1 = arith.constant 0 : index
    %c0_2 = arith.constant 0 : index
    %1 = vector.load %arg1[%c0_1, %c0_2] : memref<2x48xf32, #tpu.memory_space<vmem>>, vector<2x48xf32>
    %2 = vector.extract_strided_slice %1 {offsets = [0, 0], sizes = [1, 48], strides = [1, 1]} : vector<2x48xf32> to vector<1x48xf32>
    %3 = vector.extract_strided_slice %1 {offsets = [1, 0], sizes = [1, 48], strides = [1, 1]} : vector<2x48xf32> to vector<1x48xf32>
    %cst = arith.constant dense<0.000000e+00> : vector<48xf32>
    %4 = vector.multi_reduction <add>, %0, %cst [0] : vector<8x48xf32> to vector<48xf32>
    %5 = vector.shape_cast %4 : vector<48xf32> to vector<1x48xf32>
    %6 = arith.mulf %0, %0 : vector<8x48xf32>
    %cst_3 = arith.constant dense<0.000000e+00> : vector<48xf32>
    %7 = vector.multi_reduction <add>, %6, %cst_3 [0] : vector<8x48xf32> to vector<48xf32>
    %8 = vector.shape_cast %7 : vector<48xf32> to vector<1x48xf32>
    %cst_4 = arith.constant dense<0.000000e+00> : vector<1xf32>
    %9 = vector.multi_reduction <add>, %5, %cst_4 [1] : vector<1x48xf32> to vector<1xf32>
    %10 = vector.shape_cast %9 : vector<1xf32> to vector<1x1xf32>
    %cst_5 = arith.constant 3.840000e+02 : f32
    %11 = vector.broadcast %cst_5 : f32 to vector<1x1xf32>
    %12 = arith.divf %10, %11 : vector<1x1xf32>
    %cst_6 = arith.constant dense<0.000000e+00> : vector<1xf32>
    %13 = vector.multi_reduction <add>, %8, %cst_6 [1] : vector<1x48xf32> to vector<1xf32>
    %14 = vector.shape_cast %13 : vector<1xf32> to vector<1x1xf32>
    %cst_7 = arith.constant 3.840000e+02 : f32
    %15 = vector.broadcast %cst_7 : f32 to vector<1x1xf32>
    %16 = arith.mulf %15, %12 : vector<1x1xf32>
    %17 = arith.mulf %16, %12 : vector<1x1xf32>
    %18 = arith.subf %14, %17 : vector<1x1xf32>
    %cst_8 = arith.constant 3.830000e+02 : f32
    %19 = vector.broadcast %cst_8 : f32 to vector<1x1xf32>
    %20 = arith.divf %18, %19 : vector<1x1xf32>
    %cst_9 = arith.constant 0.000000e+00 : f32
    %21 = vector.broadcast %cst_9 : f32 to vector<1x1xf32>
    %22 = arith.maximumf %20, %21 : vector<1x1xf32>
    %cst_10 = arith.constant 9.99999974E-6 : f32
    %23 = vector.broadcast %cst_10 : f32 to vector<1x1xf32>
    %24 = arith.addf %22, %23 : vector<1x1xf32>
    %25 = math.rsqrt %24 : vector<1x1xf32>
    %26 = vector.broadcast %25 : vector<1x1xf32> to vector<1x48xf32>
    %27 = arith.mulf %26, %2 : vector<1x48xf32>
    %28 = vector.broadcast %12 : vector<1x1xf32> to vector<1x48xf32>
    %29 = arith.mulf %28, %27 : vector<1x48xf32>
    %30 = arith.subf %3, %29 : vector<1x48xf32>
    %31 = vector.broadcast %27 : vector<1x48xf32> to vector<8x48xf32>
    %32 = arith.mulf %0, %31 : vector<8x48xf32>
    %33 = vector.broadcast %30 : vector<1x48xf32> to vector<8x48xf32>
    %34 = arith.addf %32, %33 : vector<8x48xf32>
    %c0_11 = arith.constant 0 : index
    %c0_12 = arith.constant 0 : index
    %35 = vector.load %arg2[%c0_11, %c0_12] : memref<8x48xf32, #tpu.memory_space<vmem>>, vector<8x48xf32>
    tpu.vector_store %arg2[%c0_11, %c0_12], %34 {strides = array<i32>} : memref<8x48xf32, #tpu.memory_space<vmem>>, vector<8x48xf32>,
    return
  }
}

</mosaic_0001>

<llo_original>
// kernel: groupnorm_pallas.1
$region0: #{groupnorm_pallas.1}
  #allocation0 [shape = 'u32[]', space=smem, size = 0x4, offset = 0x4, fixed_abs, tag = 'smem constant byte address 0x4 - core index']
  #allocation1 [shape = 'u32[144,128]{1,0:T(1,128)}', space=vmem, size = 0x12000, scoped, tag = 'internal scratch']
  %s0 = inlined_call_operand.hbm [shape: f32[8,48], index: 0, kind: input, shape index: {}]
  %s1 = inlined_call_operand.vmem [shape: f32[2,48], index: 1, kind: input, shape index: {}]
  %s2 = inlined_call_operand.hbm [shape: f32[8,48], index: 2, kind: output, shape index: {}]
  %s3 = sld [smem:[#allocation0]]
  $region22: #{groupnorm_pallas.1} parent=0
    _
  %s5 = ssub.s32 1, %s3
  %s6 = scalar_select 0, %s5, %s3
  $region1: #{groupnorm_pallas.1} parent=0
    #allocation2 [shape = 'u8[4096]{0}', space=vmem, size = 0x1000, scoped, tag = 'input window, operand 0, single buffered']
    #allocation3 [shape = 's32[1]{0}', space=sflag, size = 0x4, scoped, tag = 'scoped memory for groupnorm_pallas.1']
    #allocation4 [shape = 's32[1]{0}', space=sflag, size = 0x4, scoped, tag = 'scoped memory for groupnorm_pallas.1']
    #allocation5 [shape = 'u8[4096]{0}', space=vmem, size = 0x1000, scoped, tag = 'output window, operand 0, single buffered']
    %7 = vsyncpa [#allocation3], 0
    %8 = vsyncpa [#allocation4], 0
    // Predicated region
    $region2: #{groupnorm_pallas.1} parent=1 // pred_check
      _
    $region3: #{groupnorm_pallas.1} parent=1 // pred_check_branch
      %10 = sbr.rel (0) target = $region5
    $region4: #{groupnorm_pallas.1} parent=1 // pred_region
      %s12 = ssub.s32 128, 128
      %13 = vsyncadd [#allocation3], %s12
      %s15 = sshll.u32 [#allocation2], 4
      %s16 = int_to_ptr.vmem [resolvable:$true] %s15
      %18 = dma.hbm_to_vmem [thread:$0]  %s0, 128, %s16, [#allocation3]
    $region5: #{groupnorm_pallas.1} parent=1 // pred_fallthru
      _
    // Predicated region
    $region6: #{groupnorm_pallas.1} parent=1 // pred_check
      _
    $region7: #{groupnorm_pallas.1} parent=1 // pred_check_branch
      %20 = sbr.rel (0) target = $region9
    $region8: #{groupnorm_pallas.1} parent=1 // pred_region
      _
    $region9: #{groupnorm_pallas.1} parent=1 // pred_fallthru
      _
    // Predicated region
    $region10: #{groupnorm_pallas.1} parent=1 // pred_check
      _
    $region11: #{groupnorm_pallas.1} parent=1 // pred_check_branch
      %22 = sbr.rel (0) target = $region13
    $region12: #{groupnorm_pallas.1} parent=1 // pred_region
      %23 = dma.done [#allocation3], 128
    $region13: #{groupnorm_pallas.1} parent=1 // pred_fallthru
      _
    %v24 = vld [vmem:[#allocation2] sm:$0xff]
    %v25 = vld [vmem:[%s1] sm:$0x3]
    %vm26 = vcmask 392192
    %v27 = vsel %vm26, %v24, 0.0
    %v28 = vrot.slane %v27, 4
    %v29 = vadd.f32 %v27, %v28
    %v30 = vrot.slane %v29, 2
    %v31 = vadd.f32 %v29, %v30
    %v32 = vrot.slane %v31, 1
    %v33 = vadd.f32 %v31, %v32
    %v34 = vmul.f32 %v24, %v24
    %v35 = vsel %vm26, %v34, 0.0
    %v36 = vrot.slane %v35, 4
    %v37 = vadd.f32 %v35, %v36
    %v38 = vrot.slane %v37, 2
    %v39 = vadd.f32 %v37, %v38
    %v40 = vrot.slane %v39, 1
    %v41 = vadd.f32 %v39, %v40
    %v42 = vsel %vm26, %v33, 0.0
    %43 = vadd.xlane.f32.xlu0 %v42
    %v44 = vpop.xlane.xlu0 %43
    %v45 = vrcp.pop 384.0
    %v46 = vmul.f32 %v44, %v45
    %v47 = vsel %vm26, %v41, 0.0
    %48 = vadd.xlane.f32.xlu0 %v47
    %v49 = vpop.xlane.xlu0 %48
    %v50 = vmul.f32 %v46, 384.0
    %v51 = vmul.f32 %v50, %v46
    %v52 = vsub.f32 %v49, %v51
    %v53 = vrcp.pop 383.0
    %v54 = vmul.f32 %v52, %v53
    %v55 = vmax.f32 %v54, 0.0
    %v56 = vadd.f32 %v55, 1e-05
    %v57 = vrsqrt.pop %v56
    %v58 = vmul.f32 %v57, %v25
    %v59 = vmul.f32 %v46, %v58
    %v61 = vrot.slane %v59, 7
    %v63 = vsub.f32 %v25, %v61
    %v64 = vlaneseq
    %v65 = vshrl.u32 %v64, 7
    %v66 = vsub.s32 0, %v65
    %v67 = vrot.slane %v58, %v66
    %v68 = vmul.f32 %v24, %v67
    %v69 = vlaneseq
    %v70 = vshrl.u32 %v69, 7
    %v71 = vsub.s32 1, %v70
    %v72 = vrot.slane %v63, %v71
    %v73 = vadd.f32 %v68, %v72
    %74 = vst.msk [vmem:[#allocation5] sm:$0xff] %vm26, %v73
    // Predicated region
    $region14: #{groupnorm_pallas.1} parent=1 // pred_check
      _
    $region15: #{groupnorm_pallas.1} parent=1 // pred_check_branch
      %76 = sbr.rel (0) target = $region17
    $region16: #{groupnorm_pallas.1} parent=1 // pred_region
      %s78 = ssub.s32 128, 128
      %79 = vsyncadd [#allocation4], %s78
      %s81 = sshll.u32 [#allocation5], 4
      %s82 = int_to_ptr.vmem [resolvable:$true] %s81
      %84 = dma.vmem_to_hbm [thread:$0]  %s82, 128, %s2, [#allocation4]
    $region17: #{groupnorm_pallas.1} parent=1 // pred_fallthru
      _
    // Predicated region
    $region18: #{groupnorm_pallas.1} parent=1 // pred_check
      _
    $region19: #{groupnorm_pallas.1} parent=1 // pred_check_branch
      %86 = sbr.rel (0) target = $region21
    $region20: #{groupnorm_pallas.1} parent=1 // pred_region
      %87 = dma.done [#allocation4], 128
    $region21: #{groupnorm_pallas.1} parent=1 // pred_fallthru
      _
    %88 = vsyncpa [#allocation3], 1
    %89 = vsyncpa [#allocation4], 1

</llo_original>
